<compile_context>
chip_gen: v6e
topology: v6e:2x2x1
jax: 0.10.0
libtpu: 0.0.40
codegen_flags: <defaults>
</compile_context>

<pallas_src>
import functools

import jax
import jax.numpy as jnp
import numpy as np
from jax.experimental import pallas as pl
from jax.experimental.pallas import tpu as pltpu


def _laplace_kernel(x_ref, o_ref, xp_ref, *, pp):
    """x_ref:  (TILE_N, H, W) block of single-channel images.
    o_ref:  (TILE_N, H+2pp-2, W+2pp-2) dense filtered block (lane-dense).
    xp_ref: (TILE_N, H+2pp, W+2pp) VMEM zero-ring pad scratch."""
    tn, h, w = x_ref.shape
    hp, wp = h + 2 * pp, w + 2 * pp
    dt = xp_ref.dtype

    # Zero only the 2*pp border strips each step (cheap: ~2*pp*(hp+wp) elems
    # per image vs a full hp*wp fill).  Re-zeroing every step keeps the kernel
    # correct when the grid is sharded across TensorCores (per-core scratch).
    xp_ref[:, 0:pp, :] = jnp.zeros((tn, pp, wp), dt)
    xp_ref[:, hp - pp:hp, :] = jnp.zeros((tn, pp, wp), dt)
    xp_ref[:, :, 0:pp] = jnp.zeros((tn, hp, pp), dt)
    xp_ref[:, :, wp - pp:wp] = jnp.zeros((tn, hp, pp), dt)
    # Interior copy at a (pp, pp) offset: zero-padding without extra HBM traffic.
    xp_ref[:, pp:pp + h, pp:pp + w] = x_ref[...]

    # 5-point Laplace stencil, computed in f32, cast only at the store.
    c = xp_ref[:, 1:hp - 1, 1:wp - 1].astype(jnp.float32)
    ud = (xp_ref[:, 0:hp - 2, 1:wp - 1].astype(jnp.float32)
          + xp_ref[:, 2:hp, 1:wp - 1].astype(jnp.float32))
    lr = (xp_ref[:, 1:hp - 1, 0:wp - 2].astype(jnp.float32)
          + xp_ref[:, 1:hp - 1, 2:wp].astype(jnp.float32))
    o_ref[...] = (4.0 * c - (ud + lr)).astype(o_ref.dtype)


def _round_up(a, b):
    return -(-a // b) * b


def _vmem_limit_bytes():
    """Per-generation scoped-VMEM limit: ~75% of physical, capped at 100 MiB."""
    try:
        cap = pltpu.get_tpu_info().vmem_capacity_bytes
    except Exception:
        cap = 64 * 1024 * 1024  # conservative fallback (v7x per-TC VMEM)
    return max(32 * 1024 * 1024, min(3 * cap // 4, 100 * 1024 * 1024))


def _pick_tile_n(n, h, w, hp, wp, itemsize, budget_bytes):
    """TILE_N from the tile-padded VMEM footprint (dtype-correct sublanes)."""
    sub = max(8, 32 // max(itemsize, 1))  # 8 rows f32, 16 bf16, 32 int8/fp8
    in_img = _round_up(h, sub) * _round_up(w, 128) * itemsize
    out_img = _round_up(hp - 2, sub) * _round_up(wp - 2, 128) * itemsize
    pad_img = _round_up(hp, sub) * _round_up(wp, 128) * itemsize
    per_img = 2 * (in_img + out_img) + pad_img  # x2: double-buffered in/out
    t_mem = max(1, budget_bytes // per_img)
    # Keep >= 4 grid steps when N allows: shards across v7x's 2 TensorCores
    # and keeps the input/output pipeline busy (no-op loss on v5e/v6e).
    t_par = pl.cdiv(n, 4) if n >= 4 else n
    return int(max(1, min(n, t_mem, t_par, 1024)))


def laplace(x, padding=0):
    """Pallas implementation of Laplace.forward.

    x: (N, 1, H, W) array (single input channel, as required by the
    (1,1,3,3) Laplace filter).  Returns (N, 1, H+2p-2, W+2p-2)."""
    n, cin, h, w = x.shape
    assert cin == 1, "Laplace filter has a single input channel"
    hout, wout = h + 2 * padding - 2, w + 2 * padding - 2
    assert hout > 0 and wout > 0, "input too small for a 3x3 conv"

    pp = max(padding, 1)             # pad ring held in VMEM scratch
    hp, wp = h + 2 * pp, w + 2 * pp  # scratch dims
    hd, wd = hp - 2, wp - 2          # dense kernel output dims (>= exact)

    xf = x.reshape(n, h, w)          # drop singleton channel (metadata only)

    vmem_limit = _vmem_limit_bytes()
    tile_n = _pick_tile_n(n, h, w, hp, wp, xf.dtype.itemsize,
                          budget_bytes=int(vmem_limit * 0.6))
    grid_n = pl.cdiv(n, tile_n)

    y = pl.pallas_call(
        functools.partial(_laplace_kernel, pp=pp),
        out_shape=jax.ShapeDtypeStruct((n, hd, wd), x.dtype),
        grid=(grid_n,),
        in_specs=[pl.BlockSpec((tile_n, h, w), lambda i: (i, 0, 0))],
        out_specs=pl.BlockSpec((tile_n, hd, wd), lambda i: (i, 0, 0)),
        scratch_shapes=[pltpu.VMEM((tile_n, hp, wp), xf.dtype)],
        compiler_params=pltpu.CompilerParams(
            dimension_semantics=("parallel",),  # grid tiles are independent
            vmem_limit_bytes=int(vmem_limit),
        ),
    )(xf)

    if padding == 0:
        # The dense slab carries one dead ring (pp=1 but p=0); slice it off.
        y = y[:, 1:hd - 1, 1:wd - 1]
    return y.reshape(n, 1, hout, wout)


def _reference_laplace(x_np, padding=0):
    """NumPy reference mirroring F.conv2d(x, laplace_3x3, padding=p)."""
    n, c, h, w = x_np.shape
    xf = x_np.reshape(n, h, w).astype(np.float32)
    if padding:
        xf = np.pad(xf, ((0, 0), (padding, padding), (padding, padding)))
    cen = xf[:, 1:-1, 1:-1]
    up = xf[:, :-2, 1:-1]
    dn = xf[:, 2:, 1:-1]
    lf = xf[:, 1:-1, :-2]
    rt = xf[:, 1:-1, 2:]
    out = 4.0 * cen - up - dn - lf - rt
    return out.reshape(n, 1, out.shape[1], out.shape[2])


if __name__ == "__main__":
    key = jax.random.PRNGKey(0)
    # A small stack of single-channel 16x16 maps (e.g. conv weights reshaped
    # to (ic*oc, 1, k1, k2), as the regularizer uses them).
    n, h, w = 8, 16, 16
    x = jax.random.normal(key, (n, 1, h, w), dtype=jnp.float32)

    # Module default: padding=0 (valid 3x3 conv).
    y0 = jax.block_until_ready(laplace(x, padding=0))
    ref0 = _reference_laplace(np.asarray(x), padding=0)
    assert y0.shape == ref0.shape, (y0.shape, ref0.shape)
    assert np.allclose(np.asarray(y0), ref0, rtol=1e-5, atol=1e-5)

    # SAME-padding path (padding=1).
    y1 = jax.block_until_ready(laplace(x, padding=1))
    ref1 = _reference_laplace(np.asarray(x), padding=1)
    assert y1.shape == ref1.shape, (y1.shape, ref1.shape)
    assert np.allclose(np.asarray(y1), ref1, rtol=1e-5, atol=1e-5)

    print("KERNEL_OK")
</pallas_src>

<mosaic_0001>
module attributes {stable_mosaic.version = 11 : i64} {
  func.func @_laplace_kernel(%arg0: i32, %arg1: memref<2x16x16xf32, #tpu.memory_space<vmem>>, %arg2: memref<2x16x16xf32, #tpu.memory_space<vmem>>, %arg3: memref<2x18x18xf32, #tpu.memory_space<vmem>>) attributes {dimension_semantics = [#tpu.dimension_semantics<parallel>], iteration_bounds = array<i64: 4>, scalar_prefetch = 0 : i64, scratch_operands = 1 : i64, tpu.core_type = #tpu.core_type<tc>, window_params = [{transform_indices = @transform_0, window_bounds = array<i64: 2, 16, 16>}, {transform_indices = @transform_1, window_bounds = array<i64: 2, 16, 16>}]} {
    %cst = arith.constant 0.000000e+00 : f32
    %0 = vector.broadcast %cst : f32 to vector<2x1x18xf32>
    %c0 = arith.constant 0 : index
    %c0_0 = arith.constant 0 : index
    %c0_1 = arith.constant 0 : index
    %1 = vector.load %arg3[%c0, %c0_0, %c0_1] : memref<2x18x18xf32, #tpu.memory_space<vmem>>, vector<2x1x18xf32>
    tpu.vector_store %arg3[%c0, %c0_0, %c0_1], %0 {strides = array<i32>} : memref<2x18x18xf32, #tpu.memory_space<vmem>>, vector<2x1x18xf32>,
    %cst_2 = arith.constant 0.000000e+00 : f32
    %2 = vector.broadcast %cst_2 : f32 to vector<2x1x18xf32>
    %c0_3 = arith.constant 0 : index
    %c17 = arith.constant 17 : index
    %c0_4 = arith.constant 0 : index
    %3 = vector.load %arg3[%c0_3, %c17, %c0_4] : memref<2x18x18xf32, #tpu.memory_space<vmem>>, vector<2x1x18xf32>
    tpu.vector_store %arg3[%c0_3, %c17, %c0_4], %2 {strides = array<i32>} : memref<2x18x18xf32, #tpu.memory_space<vmem>>, vector<2x1x18xf32>,
    %cst_5 = arith.constant 0.000000e+00 : f32
    %4 = vector.broadcast %cst_5 : f32 to vector<2x18x1xf32>
    %c0_6 = arith.constant 0 : index
    %c0_7 = arith.constant 0 : index
    %c0_8 = arith.constant 0 : index
    %5 = vector.load %arg3[%c0_6, %c0_7, %c0_8] : memref<2x18x18xf32, #tpu.memory_space<vmem>>, vector<2x18x1xf32>
    tpu.vector_store %arg3[%c0_6, %c0_7, %c0_8], %4 {strides = array<i32>} : memref<2x18x18xf32, #tpu.memory_space<vmem>>, vector<2x18x1xf32>,
    %cst_9 = arith.constant 0.000000e+00 : f32
    %6 = vector.broadcast %cst_9 : f32 to vector<2x18x1xf32>
    %c0_10 = arith.constant 0 : index
    %c0_11 = arith.constant 0 : index
    %c17_12 = arith.constant 17 : index
    %7 = vector.load %arg3[%c0_10, %c0_11, %c17_12] : memref<2x18x18xf32, #tpu.memory_space<vmem>>, vector<2x18x1xf32>
    tpu.vector_store %arg3[%c0_10, %c0_11, %c17_12], %6 {strides = array<i32>} : memref<2x18x18xf32, #tpu.memory_space<vmem>>, vector<2x18x1xf32>,
    %c0_13 = arith.constant 0 : index
    %c0_14 = arith.constant 0 : index
    %c0_15 = arith.constant 0 : index
    %8 = vector.load %arg1[%c0_13, %c0_14, %c0_15] : memref<2x16x16xf32, #tpu.memory_space<vmem>>, vector<2x16x16xf32>
    %c0_16 = arith.constant 0 : index
    %c1 = arith.constant 1 : index
    %c1_17 = arith.constant 1 : index
    %9 = vector.load %arg3[%c0_16, %c1, %c1_17] : memref<2x18x18xf32, #tpu.memory_space<vmem>>, vector<2x16x16xf32>
    tpu.vector_store %arg3[%c0_16, %c1, %c1_17], %8 {strides = array<i32>} : memref<2x18x18xf32, #tpu.memory_space<vmem>>, vector<2x16x16xf32>,
    %c0_18 = arith.constant 0 : index
    %c1_19 = arith.constant 1 : index
    %c1_20 = arith.constant 1 : index
    %10 = vector.load %arg3[%c0_18, %c1_19, %c1_20] : memref<2x18x18xf32, #tpu.memory_space<vmem>>, vector<2x16x16xf32>
    %c0_21 = arith.constant 0 : index
    %c0_22 = arith.constant 0 : index
    %c1_23 = arith.constant 1 : index
    %11 = vector.load %arg3[%c0_21, %c0_22, %c1_23] : memref<2x18x18xf32, #tpu.memory_space<vmem>>, vector<2x16x16xf32>
    %c0_24 = arith.constant 0 : index
    %c2 = arith.constant 2 : index
    %c1_25 = arith.constant 1 : index
    %12 = vector.load %arg3[%c0_24, %c2, %c1_25] : memref<2x18x18xf32, #tpu.memory_space<vmem>>, vector<2x16x16xf32>
    %13 = arith.addf %11, %12 : vector<2x16x16xf32>
    %c0_26 = arith.constant 0 : index
    %c1_27 = arith.constant 1 : index
    %c0_28 = arith.constant 0 : index
    %14 = vector.load %arg3[%c0_26, %c1_27, %c0_28] : memref<2x18x18xf32, #tpu.memory_space<vmem>>, vector<2x16x16xf32>
    %c0_29 = arith.constant 0 : index
    %c1_30 = arith.constant 1 : index
    %c2_31 = arith.constant 2 : index
    %15 = vector.load %arg3[%c0_29, %c1_30, %c2_31] : memref<2x18x18xf32, #tpu.memory_space<vmem>>, vector<2x16x16xf32>
    %16 = arith.addf %14, %15 : vector<2x16x16xf32>
    %cst_32 = arith.constant 4.000000e+00 : f32
    %17 = vector.broadcast %cst_32 : f32 to vector<2x16x16xf32>
    %18 = arith.mulf %17, %10 : vector<2x16x16xf32>
    %19 = arith.addf %13, %16 : vector<2x16x16xf32>
    %20 = arith.subf %18, %19 : vector<2x16x16xf32>
    %c0_33 = arith.constant 0 : index
    %c0_34 = arith.constant 0 : index
    %c0_35 = arith.constant 0 : index
    %21 = vector.load %arg2[%c0_33, %c0_34, %c0_35] : memref<2x16x16xf32, #tpu.memory_space<vmem>>, vector<2x16x16xf32>
    tpu.vector_store %arg2[%c0_33, %c0_34, %c0_35], %20 {strides = array<i32>} : memref<2x16x16xf32, #tpu.memory_space<vmem>>, vector<2x16x16xf32>,
    return
  }
  func.func @transform_0(%arg0: i32) -> (i32, i32, i32) {
    %c0_i32 = arith.constant 0 : i32
    %c0_i32_0 = arith.constant 0 : i32
    %c0_i32_1 = arith.constant 0 : i32
    return %arg0, %c0_i32, %c0_i32_0 : i32, i32, i32
  }
  func.func @transform_1(%arg0: i32) -> (i32, i32, i32) {
    %c0_i32 = arith.constant 0 : i32
    %c0_i32_0 = arith.constant 0 : i32
    %c0_i32_1 = arith.constant 0 : i32
    return %arg0, %c0_i32, %c0_i32_0 : i32, i32, i32
  }
}

</mosaic_0001>

<llo_original>
// kernel: tpu_custom_call.1
$region0: #{tpu_custom_call.1}
  #allocation0 [shape = 'u32[]', space=smem, size = 0x4, offset = 0x4, fixed_abs, tag = 'smem constant byte address 0x4 - core index']
  #allocation1 [shape = 'u32[144,128]{1,0:T(1,128)}', space=vmem, size = 0x12000, scoped, tag = 'internal scratch']
  #allocation2 [shape = 'f32[2,18,18]{2,1,0:T(8,128)}', space=vmem, size = 0x6000, scoped, tag = 'scratch operand']
  %s0 = inlined_call_operand.hbm [shape: f32[8,16,16], index: 0, kind: input, shape index: {}]
  %s1 = inlined_call_operand.hbm [shape: f32[8,16,16], index: 1, kind: output, shape index: {}]
  %s2 = sld [smem:[#allocation0]]
  $region41: #{tpu_custom_call.1} parent=0
    _
  %s4 = ssub.s32 1, %s2
  %s5 = scalar_select 0, %s4, %s2
  $region1: #{tpu_custom_call.1} parent=0
    #allocation3 [shape = 'u8[32768]{0}', space=vmem, size = 0x8000, scoped, tag = 'input window, operand 0']
    #allocation4 [shape = 's32[2]{0}', space=sflag, size = 0x8, scoped, tag = 'scoped memory for tpu_custom_call.1']
    #allocation5 [shape = 's32[2]{0}', space=sflag, size = 0x8, scoped, tag = 'scoped memory for tpu_custom_call.1']
    #allocation6 [shape = 'u8[32768]{0}', space=vmem, size = 0x8000, scoped, tag = 'output window, operand 0']
    %6 = vsyncpa [#allocation4], 0
    %s7 = scalar_lea.sflag [#allocation4], 1
    %8 = vsyncpa %s7, 0
    %9 = vsyncpa [#allocation5], 0
    %s10 = scalar_lea.sflag [#allocation5], 1
    %11 = vsyncpa %s10, 0
    loop: start=0, step=1, limit=6
    $region2: #{tpu_custom_call.1} parent=1 // loop_pre_header
      _
    $region3: #{tpu_custom_call.1} parent=1 // loop_header
      %s13 = sphi 0, %s17
      %p14 = scmp.ge.s32.totalorder %s13, 6
      %s23 = sphi 0, %s25
      %s26 = sphi 0, %s23
      %s27 = sphi 0, %s26
      %s43 = sphi 0, %s27
      %s49 = sphi 0, %s51
      %s52 = sphi 0, %s49
      %s53 = sphi 0, %s52
      %s69 = sphi 0, %s53
    $region4: #{tpu_custom_call.1} parent=1 // loop_header_branch
      %16 = sbr.rel (%p14) target = $region8
    $region5: #{tpu_custom_call.1} parent=1 // loop_body
      %s18 = ssub.s32 %s13, 1
      %s19 = ssub.s32 %s13, 2
      %s20 = sadd.s32 %s13, 1
      %s21 = ssub.s32 %s13, %s20
      %p22 = scmp.eq.s32.totalorder %s21, 0
      %s24 = sadd.s32 %s23, 1
      %s25 = scalar_select %p22, %s23, %s24
      %p28 = pneg %p22
      %p29 = scmp.eq.s32.totalorder %s13, 3
      %p30 = por %p28, %p29
      %p31 = scmp.ne.s32.totalorder %s23, %s26
      %p32 = scmp.eq.s32.totalorder %s13, 0
      %p33 = por %p31, %p32
      %p34 = scmp.ne.s32.totalorder %s23, %s26
      %p35 = scmp.eq.s32.totalorder %s18, 3
      %p36 = por %p34, %p35
      %p37 = scmp.ne.s32.totalorder %s26, %s27
      %p38 = scmp.eq.s32.totalorder %s18, 0
      %p39 = por %p37, %p38
      %p40 = scmp.ne.s32.totalorder %s26, %s27
      %p41 = scmp.eq.s32.totalorder %s19, 3
      %p42 = por %p40, %p41
      %p44 = scmp.ne.s32.totalorder %s27, %s43
      %p45 = scmp.eq.s32.totalorder %s19, 0
      %p46 = por %p44, %p45
      %s47 = ssub.s32 %s13, %s20
      %p48 = scmp.eq.s32.totalorder %s47, 0
      %s50 = sadd.s32 %s49, 1
      %s51 = scalar_select %p48, %s49, %s50
      %p54 = pneg %p48
      %p55 = scmp.eq.s32.totalorder %s13, 3
      %p56 = por %p54, %p55
      %p57 = scmp.ne.s32.totalorder %s49, %s52
      %p58 = scmp.eq.s32.totalorder %s13, 0
      %p59 = por %p57, %p58
      %p60 = scmp.ne.s32.totalorder %s49, %s52
      %p61 = scmp.eq.s32.totalorder %s18, 3
      %p62 = por %p60, %p61
      %p63 = scmp.ne.s32.totalorder %s52, %s53
      %p64 = scmp.eq.s32.totalorder %s18, 0
      %p65 = por %p63, %p64
      %p66 = scmp.ne.s32.totalorder %s52, %s53
      %p67 = scmp.eq.s32.totalorder %s19, 3
      %p68 = por %p66, %p67
      %p70 = scmp.ne.s32.totalorder %s53, %s69
      %p71 = scmp.eq.s32.totalorder %s19, 0
      %p72 = por %p70, %p71
      %p73 = scmp.le.s32.totalorder 1, %s13
      %p74 = scmp.lt.s32.totalorder %s13, 5
      %p75 = pnand %p73, %p74
      %p76 = pneg %p75
      // Predicated region
      $region9: #{tpu_custom_call.1} parent=5 // pred_check
        _
      $region10: #{tpu_custom_call.1} parent=5 // pred_check_branch
        %78 = sbr.rel (%p75) target = $region12
      $region11: #{tpu_custom_call.1} parent=5 // pred_region
        %s79 = ssub.s32 %s13, 1
      $region12: #{tpu_custom_call.1} parent=5 // pred_fallthru
        _
      %p80 = scmp.lt.s32.totalorder %s13, 4
      // Predicated region
      $region13: #{tpu_custom_call.1} parent=5 // pred_check
        %p81 = pneg %p80
      $region14: #{tpu_custom_call.1} parent=5 // pred_check_branch
        %83 = sbr.rel (%p81) target = $region16
      $region15: #{tpu_custom_call.1} parent=5 // pred_region
        // Predicated region
        $region17: #{tpu_custom_call.1} parent=15 // pred_check
          %p84 = pneg %p33
        $region18: #{tpu_custom_call.1} parent=15 // pred_check_branch
          %86 = sbr.rel (%p84) target = $region20
        $region19: #{tpu_custom_call.1} parent=15 // pred_region
          %s87 = sand.u32 %s23, 1
          %s88 = scalar_lea.sflag [#allocation4], %s87
          %s89 = sand.u32 %s23, 1
          %s90 = smul.addr %s89, 32
          %s91 = scalar_lea.vmem [#allocation3], %s90
          %s92 = smul.u32 2, %s13
          %s94 = ssub.s32 512, 512
          %95 = vsyncadd %s88, %s94
          %s96 = smul.addr %s92, 2
          %s97 = smul.addr %s96, 128
          %s98 = scalar_lea.hbm %s0, %s97
          %s99 = sshll.u32 %s91, 4
          %s100 = int_to_ptr.vmem [resolvable:$true] %s99
          %105 = dma.hbm_to_vmem [thread:$0]  %s98, 512, %s100, %s88, 128, 128, 8
        $region20: #{tpu_custom_call.1} parent=15 // pred_fallthru
          _
      $region16: #{tpu_custom_call.1} parent=5 // pred_fallthru
        _
      %p106 = scmp.le.s32.totalorder 1, %s13
      %p107 = scmp.lt.s32.totalorder %s13, 5
      %p108 = pnand %p106, %p107
      %p109 = pneg %p108
      // Predicated region
      $region21: #{tpu_custom_call.1} parent=5 // pred_check
        _
      $region22: #{tpu_custom_call.1} parent=5 // pred_check_branch
        %111 = sbr.rel (%p108) target = $region24
      $region23: #{tpu_custom_call.1} parent=5 // pred_region
        %s112 = ssub.s32 %s13, 1
        %s113 = sand.u32 %s26, 1
        %s114 = scalar_lea.sflag [#allocation4], %s113
        %s115 = sand.u32 %s26, 1
        %s116 = smul.addr %s115, 32
        %s117 = scalar_lea.vmem [#allocation3], %s116
        // Predicated region
        $region25: #{tpu_custom_call.1} parent=23 // pred_check
          %p118 = pneg %p39
        $region26: #{tpu_custom_call.1} parent=23 // pred_check_branch
          %120 = sbr.rel (%p118) target = $region28
        $region27: #{tpu_custom_call.1} parent=23 // pred_region
          %121 = dma.done %s114, 512
        $region28: #{tpu_custom_call.1} parent=23 // pred_fallthru
          _
        %s122 = sand.u32 %s26, 1
        %s123 = scalar_lea.sflag [#allocation4], %s122
        %s124 = sand.u32 %s26, 1
        %s125 = smul.addr %s124, 32
        %s126 = scalar_lea.vmem [#allocation3], %s125
        %p127 = pneg %p39
        %p128 = pneg %p36
        %p129 = pneg %p65
        %p130 = pneg %p62
        %s131 = sand.u32 %s52, 1
        %s132 = scalar_lea.sflag [#allocation5], %s131
        %s133 = sand.u32 %s52, 1
        %s134 = smul.addr %s133, 32
        %s135 = scalar_lea.vmem [#allocation6], %s134
        %s136 = smul.u32 2, %s18
        %s137 = smul.u32 2, %s18
        %vm138 = vcmask 139264
        %139 = vst.msk [vmem:[#allocation2] sm:$0x1] %vm138, 0.0
        %140 = vst.msk [vmem:[#allocation2 + $0x18] sm:$0x1] %vm138, 0.0
        %141 = vst.msk [vmem:[#allocation2 + $0x11] sm:$0x1] %vm138, 0.0
        %142 = vst.msk [vmem:[#allocation2 + $0x29] sm:$0x1] %vm138, 0.0
        %vm143 = vcmask 7168
        %144 = vst.msk [vmem:[#allocation2] sm:$0xff] %vm143, 0.0
        %145 = vst.msk [vmem:[#allocation2 + $0x8] sm:$0xff] %vm143, 0.0
        %vm146 = vcmask 1024
        %147 = vst.msk [vmem:[#allocation2 + $0x10] sm:$0x3] %vm146, 0.0
        %148 = vst.msk [vmem:[#allocation2 + $0x18] sm:$0xff] %vm143, 0.0
        %149 = vst.msk [vmem:[#allocation2 + $0x20] sm:$0xff] %vm143, 0.0
        %150 = vst.msk [vmem:[#allocation2 + $0x28] sm:$0x3] %vm146, 0.0
        %vm151 = vcmask 146568
        %152 = vst.msk [vmem:[#allocation2] sm:$0xff] %vm151, 0.0
        %153 = vst.msk [vmem:[#allocation2 + $0x8] sm:$0xff] %vm151, 0.0
        %vm154 = vcmask 140424
        %155 = vst.msk [vmem:[#allocation2 + $0x10] sm:$0x3] %vm154, 0.0
        %156 = vst.msk [vmem:[#allocation2 + $0x18] sm:$0xff] %vm151, 0.0
        %157 = vst.msk [vmem:[#allocation2 + $0x20] sm:$0xff] %vm151, 0.0
        %158 = vst.msk [vmem:[#allocation2 + $0x28] sm:$0x3] %vm154, 0.0
        %v159 = vld [vmem:[%s117] sm:$0xff]
        %v160 = vld [vmem:[%s117 + $0x8] sm:$0xff]
        %v161 = vld [vmem:[%s117 + $0x10] sm:$0xff]
        %v162 = vld [vmem:[%s117 + $0x18] sm:$0xff]
        %167 = vrot.lane.b32.xlu0 %v159, 1
        %v168 = vpop.permute.xlu0 %167
        %169 = vrot.lane.b32.xlu0 %v160, 1
        %v170 = vpop.permute.xlu0 %169
        %171 = vrot.lane.b32.xlu0 %v161, 1
        %v172 = vpop.permute.xlu0 %171
        %173 = vrot.lane.b32.xlu0 %v162, 1
        %v174 = vpop.permute.xlu0 %173
        %vm179 = vcmask 138248
        %180 = vst.msk [vmem:[#allocation2 + $0x1] sm:$0xff] %vm179, %v168
        %181 = vst.msk [vmem:[#allocation2 + $0x9] sm:$0xff] %vm179, %v170
        %182 = vst.msk [vmem:[#allocation2 + $0x19] sm:$0xff] %vm179, %v172
        %183 = vst.msk [vmem:[#allocation2 + $0x21] sm:$0xff] %vm179, %v174
        %v184 = vld [vmem:[#allocation2 + $0x1] sm:$0xff]
        %v185 = vld [vmem:[#allocation2 + $0x9] sm:$0xff]
        %v186 = vld [vmem:[#allocation2 + $0x19] sm:$0xff]
        %v187 = vld [vmem:[#allocation2 + $0x21] sm:$0xff]
        %v188 = vld [vmem:[#allocation2] sm:$0xff]
        %v189 = vld [vmem:[#allocation2 + $0x8] sm:$0xff]
        %v190 = vld [vmem:[#allocation2 + $0x18] sm:$0xff]
        %v191 = vld [vmem:[#allocation2 + $0x20] sm:$0xff]
        %v192 = vld [vmem:[#allocation2 + $0x2] sm:$0xff]
        %v193 = vld [vmem:[#allocation2 + $0xa] sm:$0xff]
        %v194 = vld [vmem:[#allocation2 + $0x1a] sm:$0xff]
        %v195 = vld [vmem:[#allocation2 + $0x22] sm:$0xff]
        %v196 = vadd.f32 %v188, %v192
        %v197 = vadd.f32 %v189, %v193
        %v198 = vadd.f32 %v190, %v194
        %v199 = vadd.f32 %v191, %v195
        %204 = vrot.lane.b32.xlu0 %v184, 126
        %v205 = vpop.permute.xlu0 %204
        %206 = vrot.lane.b32.xlu0 %v185, 126
        %v207 = vpop.permute.xlu0 %206
        %208 = vrot.lane.b32.xlu0 %v186, 126
        %v209 = vpop.permute.xlu0 %208
        %210 = vrot.lane.b32.xlu0 %v187, 126
        %v211 = vpop.permute.xlu0 %210
        %v216 = vadd.f32 %v184, %v205
        %v217 = vadd.f32 %v185, %v207
        %v218 = vadd.f32 %v186, %v209
        %v219 = vadd.f32 %v187, %v211
        %v220 = vmul.f32 %v184, 4.0
        %v221 = vmul.f32 %v185, 4.0
        %v222 = vmul.f32 %v186, 4.0
        %v223 = vmul.f32 %v187, 4.0
        %228 = vrot.lane.b32.xlu0 %v216, 1
        %v229 = vpop.permute.xlu0 %228
        %230 = vrot.lane.b32.xlu0 %v217, 1
        %v231 = vpop.permute.xlu0 %230
        %232 = vrot.lane.b32.xlu0 %v218, 1
        %v233 = vpop.permute.xlu0 %232
        %234 = vrot.lane.b32.xlu0 %v219, 1
        %v235 = vpop.permute.xlu0 %234
        %v240 = vadd.f32 %v196, %v229
        %v241 = vadd.f32 %v197, %v231
        %v242 = vadd.f32 %v198, %v233
        %v243 = vadd.f32 %v199, %v235
        %v244 = vsub.f32 %v220, %v240
        %v245 = vsub.f32 %v221, %v241
        %v246 = vsub.f32 %v222, %v242
        %v247 = vsub.f32 %v223, %v243
        %252 = vrot.lane.b32.xlu0 %v244, 127
        %v253 = vpop.permute.xlu0 %252
        %254 = vrot.lane.b32.xlu0 %v245, 127
        %v255 = vpop.permute.xlu0 %254
        %256 = vrot.lane.b32.xlu0 %v246, 127
        %v257 = vpop.permute.xlu0 %256
        %258 = vrot.lane.b32.xlu0 %v247, 127
        %v259 = vpop.permute.xlu0 %258
        %vm264 = vcmask 130048
        %265 = vst.msk [vmem:[%s135] sm:$0xff] %vm264, %v253
        %266 = vst.msk [vmem:[%s135 + $0x8] sm:$0xff] %vm264, %v255
        %267 = vst.msk [vmem:[%s135 + $0x10] sm:$0xff] %vm264, %v257
        %268 = vst.msk [vmem:[%s135 + $0x18] sm:$0xff] %vm264, %v259
        %s269 = sand.u32 %s52, 1
        %s270 = scalar_lea.sflag [#allocation5], %s269
        %s271 = sand.u32 %s52, 1
        %s272 = smul.addr %s271, 32
        %s273 = scalar_lea.vmem [#allocation6], %s272
        // Predicated region
        $region29: #{tpu_custom_call.1} parent=23 // pred_check
          %p274 = pneg %p62
        $region30: #{tpu_custom_call.1} parent=23 // pred_check_branch
          %276 = sbr.rel (%p274) target = $region32
        $region31: #{tpu_custom_call.1} parent=23 // pred_region
          %s277 = smul.u32 2, %s18
          %s279 = ssub.s32 512, 512
          %280 = vsyncadd %s270, %s279
          %s281 = smul.addr %s277, 2
          %s282 = smul.addr %s281, 128
          %s283 = scalar_lea.hbm %s1, %s282
          %s284 = sshll.u32 %s273, 4
          %s285 = int_to_ptr.vmem [resolvable:$true] %s284
          %290 = dma.vmem_to_hbm [thread:$0]  %s285, 512, %s283, %s270, 128, 128, 8
        $region32: #{tpu_custom_call.1} parent=23 // pred_fallthru
          _
      $region24: #{tpu_custom_call.1} parent=5 // pred_fallthru
        _
      %p291 = scmp.le.s32.totalorder 2, %s13
      // Predicated region
      $region33: #{tpu_custom_call.1} parent=5 // pred_check
        %p292 = pneg %p291
      $region34: #{tpu_custom_call.1} parent=5 // pred_check_branch
        %294 = sbr.rel (%p292) target = $region36
      $region35: #{tpu_custom_call.1} parent=5 // pred_region
        %s295 = ssub.s32 %s13, 2
        // Predicated region
        $region37: #{tpu_custom_call.1} parent=35 // pred_check
          %p296 = pneg %p68
        $region38: #{tpu_custom_call.1} parent=35 // pred_check_branch
          %298 = sbr.rel (%p296) target = $region40
        $region39: #{tpu_custom_call.1} parent=35 // pred_region
          %s299 = sand.u32 %s53, 1
          %s300 = scalar_lea.sflag [#allocation5], %s299
          %s301 = sand.u32 %s53, 1
          %s302 = smul.addr %s301, 32
          %s303 = scalar_lea.vmem [#allocation6], %s302
          %304 = dma.done %s300, 512
        $region40: #{tpu_custom_call.1} parent=35 // pred_fallthru
          _
      $region36: #{tpu_custom_call.1} parent=5 // pred_fallthru
        _
    $region6: #{tpu_custom_call.1} parent=1 // loop_footer
      %s17 = sadd.s32 1, %s13
    $region7: #{tpu_custom_call.1} parent=1 // loop_footer_branch
      %12 = sbr.rel target = $region3
    $region8: #{tpu_custom_call.1} parent=1 // loop_exit
      _
    %305 = vsyncpa [#allocation4], 1
    %s306 = scalar_lea.sflag [#allocation4], 1
    %307 = vsyncpa %s306, 1
    %308 = vsyncpa [#allocation5], 1
    %s309 = scalar_lea.sflag [#allocation5], 1
    %310 = vsyncpa %s309, 1

</llo_original>
